<compile_context>
chip_gen: v6e
topology: v6e:2x2x1
jax: 0.10.0
libtpu: 0.0.40
codegen_flags: <defaults>
</compile_context>

<pallas_src>
import functools

import jax
import jax.numpy as jnp
from jax.experimental import pallas as pl
from jax.experimental.pallas import tpu as pltpu


def clap_text_output_kernel(h_ref, res_ref, w_ref, p_ref, o_ref, *,
                            eps, compute_dtype):
    # Cast the activation tile on the VPU (cheap, hidden under the DMA); the
    # HBM stream stays in the caller's dtype.
    h = h_ref[...].astype(compute_dtype)
    # Dense: (tm, K) @ (K, H) on the MXU; f32 accumulation.
    acc = jnp.dot(h, w_ref[...], preferred_element_type=jnp.float32)

    # Packed params: row 0 = dense bias, row 1 = LN gamma, row 2 = LN beta.
    params = p_ref[...].astype(jnp.float32)               # (3, H) f32
    bias = params[0:1, :]
    gamma = params[1:2, :]
    beta = params[2:3, :]

    # Dropout: identity at inference time.
    # Fuse the dense bias into the residual add.
    x = acc + (res_ref[...].astype(jnp.float32) + bias)   # (tm, H) f32

    # LayerNorm over the hidden (lane) axis — all f32 math.
    mean = jnp.mean(x, axis=-1, keepdims=True)
    centered = x - mean
    var = jnp.mean(centered * centered, axis=-1, keepdims=True)
    inv = jax.lax.rsqrt(var + eps)
    o_ref[...] = (centered * inv * gamma + beta).astype(o_ref.dtype)


def _round_up(x, m):
    return ((x + m - 1) // m) * m


def _num_tensorcores():
    """Best-effort TensorCore count (2 on v7x, 1 on v5e/v6e). Defaults to 1."""
    try:
        info = pltpu.get_tpu_info()
    except Exception:
        return 1
    for name in ("num_cores", "num_tensorcores", "tensor_cores_per_chip",
                 "cores_per_chip", "core_count"):
        val = getattr(info, name, None)
        if isinstance(val, int) and val >= 1:
            return val
    return 1


def clap_text_output(hidden_states, input_tensor, weight, bias, gamma, beta,
                     *, eps=1e-12, tm=2048, compute_dtype=jnp.bfloat16):
    """hidden_states: (..., K), input_tensor: (..., H) -> (..., H).

    compute_dtype controls the matmul operand dtype (bf16 default; pass
    jnp.float32 for exact nn.Linear-in-f32 semantics).
    """
    K = hidden_states.shape[-1]
    H = input_tensor.shape[-1]
    lead = hidden_states.shape[:-1]
    M = 1
    for d in lead:
        M *= d
    out_dtype = input_tensor.dtype

    h_isize = jnp.dtype(hidden_states.dtype).itemsize
    res_isize = jnp.dtype(input_tensor.dtype).itemsize
    out_isize = jnp.dtype(out_dtype).itemsize
    w_isize = jnp.dtype(compute_dtype).itemsize

    # Row tile: large (amortize per-step overhead; kernel is HBM-bound), but
    # capped so the double-buffered activation/output streams stay within a
    # ~24 MiB VMEM budget (safe on v7x's 64 MiB).
    row_align = 16
    stream_budget = 24 * 1024 * 1024
    per_row_bytes = 2 * (K * h_isize + H * res_isize + H * out_isize)
    tm_cap = max(row_align,
                 (stream_budget // max(per_row_bytes, 1)) // row_align * row_align)
    tm = min(tm, tm_cap)
    tm = max(row_align, _round_up(min(tm, M), row_align))

    # Generation-aware split: only when >1 TensorCore (v7x). Give each core at
    # least 2 grid steps so prefetch/writeback still overlap per core. On
    # single-TC chips (v5e/v6e) an artificial split is pure overhead -> skip.
    num_tc = _num_tensorcores()
    if num_tc > 1:
        min_steps = 2 * num_tc
        if pl.cdiv(M, tm) < min_steps and M >= min_steps * 128:
            tm = max(row_align, _round_up(pl.cdiv(M, min_steps), row_align))

    # Matmul weight in compute_dtype (tiny, resident, cast once); activations,
    # residual and LN params stream in their native dtypes.
    h2 = hidden_states.reshape(M, K)
    r2 = input_tensor.reshape(M, H)
    w2 = weight.astype(compute_dtype)                      # (K, H) resident
    params = jnp.stack([
        bias.reshape(H).astype(jnp.float32),
        gamma.reshape(H).astype(jnp.float32),
        beta.reshape(H).astype(jnp.float32),
    ], axis=0)                                             # (3, H) f32

    grid = (pl.cdiv(M, tm),)

    # VMEM: double-buffered streams + resident weight + padded params + headroom.
    stream_bytes = tm * per_row_bytes
    resident_bytes = K * H * w_isize + 2 * 8 * _round_up(H, 128) * 4
    vmem_limit = stream_bytes + resident_bytes + 8 * 1024 * 1024
    vmem_limit = int(min(max(vmem_limit, 16 * 1024 * 1024), 64 * 1024 * 1024))

    cost = pl.CostEstimate(
        flops=2 * M * K * H,
        transcendentals=M,  # one rsqrt per row
        bytes_accessed=(h2.nbytes + r2.nbytes + w2.nbytes + params.nbytes
                        + M * H * out_isize),
    )

    out = pl.pallas_call(
        functools.partial(clap_text_output_kernel, eps=eps,
                          compute_dtype=compute_dtype),
        out_shape=jax.ShapeDtypeStruct((M, H), out_dtype),
        grid_spec=pltpu.PrefetchScalarGridSpec(
            num_scalar_prefetch=0,
            grid=grid,
            in_specs=[
                # Activations stream per-row-tile (double-buffered by default).
                pl.BlockSpec((tm, K), lambda i: (i, 0)),   # hidden_states tile
                pl.BlockSpec((tm, H), lambda i: (i, 0)),   # residual tile
                # Weight never changes across the grid -> single-buffered to
                # reclaim VMEM (matters most on v7x's 64 MiB).
                pl.BlockSpec((K, H), lambda i: (0, 0),
                             pipeline_mode=pl.Buffered(1)),
                # Packed (bias, gamma, beta): one invariant block.
                pl.BlockSpec((3, H), lambda i: (0, 0)),
            ],
            out_specs=pl.BlockSpec((tm, H), lambda i: (i, 0)),
        ),
        compiler_params=pltpu.CompilerParams(
            dimension_semantics=("parallel",),
            vmem_limit_bytes=vmem_limit,
        ),
        cost_estimate=cost,
    )(h2, r2, w2, params)

    return out.reshape(*lead, H)


def reference(hidden_states, input_tensor, weight, bias, gamma, beta, eps=1e-12):
    # Mirror the kernel's bf16 matmul operands; math in f32.
    h = hidden_states.astype(jnp.bfloat16).astype(jnp.float32)
    w = weight.astype(jnp.bfloat16).astype(jnp.float32)
    x = jnp.dot(h, w, precision=jax.lax.Precision.HIGHEST) + bias + input_tensor
    mean = jnp.mean(x, axis=-1, keepdims=True)
    var = jnp.mean((x - mean) ** 2, axis=-1, keepdims=True)
    return (x - mean) * jax.lax.rsqrt(var + eps) * gamma + beta


if __name__ == "__main__":
    # Small config consistent with ClapTextConfig semantics.
    intermediate_size = 256   # config.intermediate_size
    hidden_size = 128         # config.hidden_size
    eps = 1e-12               # config.layer_norm_eps

    key = jax.random.PRNGKey(0)
    k_h, k_r, k_w, k_b, k_h2, k_r2 = jax.random.split(key, 6)

    # Deterministic synthetic parameters (shapes from nn.Linear / nn.LayerNorm).
    bound = 1.0 / (intermediate_size ** 0.5)
    weight = jax.random.uniform(
        k_w, (intermediate_size, hidden_size), minval=-bound, maxval=bound,
        dtype=jnp.float32)
    bias = jax.random.uniform(
        k_b, (hidden_size,), minval=-bound, maxval=bound, dtype=jnp.float32)
    gamma = jnp.ones((hidden_size,), dtype=jnp.float32)
    beta = jnp.zeros((hidden_size,), dtype=jnp.float32)

    def run_case(kh, kr, batch, seq):
        hs = jax.random.normal(
            kh, (batch, seq, intermediate_size), dtype=jnp.float32)
        res = jax.random.normal(
            kr, (batch, seq, hidden_size), dtype=jnp.float32)
        out = clap_text_output(hs, res, weight, bias, gamma, beta, eps=eps)
        out = jax.block_until_ready(out)
        ref = reference(hs, res, weight, bias, gamma, beta, eps)
        assert out.shape == (batch, seq, hidden_size)
        assert jnp.allclose(out, ref, atol=2e-3, rtol=2e-3), \
            float(jnp.max(jnp.abs(out - ref)))
        return out

    run_case(k_h, k_r, batch=2, seq=8)      # tiny: single (clamped) tile
    run_case(k_h2, k_r2, batch=4, seq=128)  # M=512: larger-tile path

    # TODO(synk): training-mode dropout (hidden_dropout_prob) is not implemented;
    # forward here is inference-mode (dropout = identity), matching eval().
    print("KERNEL_OK")
</pallas_src>

<mosaic_0001>
module attributes {stable_mosaic.version = 11 : i64} {
  func.func @clap_text_output_kernel(%arg0: i32, %arg1: memref<16x256xf32, #tpu.memory_space<vmem>>, %arg2: memref<16x128xf32, #tpu.memory_space<vmem>>, %arg3: memref<256x128xbf16, #tpu.memory_space<vmem>>, %arg4: memref<3x128xf32, #tpu.memory_space<vmem>>, %arg5: memref<16x128xf32, #tpu.memory_space<vmem>>) attributes {dimension_semantics = [#tpu.dimension_semantics<parallel>], iteration_bounds = array<i64: 1>, scalar_prefetch = 0 : i64, scratch_operands = 0 : i64, tpu.core_type = #tpu.core_type<tc>, window_params = [{transform_indices = @transform_0, window_bounds = array<i64: 16, 256>}, {transform_indices = @transform_1, window_bounds = array<i64: 16, 128>}, {pipeline_mode = #tpu.pipeline_mode<synchronous>, transform_indices = @transform_2, window_bounds = array<i64: 256, 128>}, {pipeline_mode = #tpu.pipeline_mode<synchronous>, transform_indices = @transform_3, window_bounds = array<i64: 3, 128>}, {transform_indices = @transform_4, window_bounds = array<i64: 16, 128>}]} {
    %c0 = arith.constant 0 : index
    %c0_0 = arith.constant 0 : index
    %0 = vector.load %arg1[%c0, %c0_0] : memref<16x256xf32, #tpu.memory_space<vmem>>, vector<16x256xf32>
    %1 = arith.truncf %0 : vector<16x256xf32> to vector<16x256xbf16>
    %c0_1 = arith.constant 0 : index
    %c0_2 = arith.constant 0 : index
    %2 = vector.load %arg3[%c0_1, %c0_2] : memref<256x128xbf16, #tpu.memory_space<vmem>>, vector<256x128xbf16>
    %cst = arith.constant dense<0.000000e+00> : vector<16x128xf32>
    %3 = tpu.matmul %1, %2, %cst {dimension_numbers = #tpu.dot_dimension_numbers<[1], [0], [0], [1], [0, 0, 1, 1], [], []>} : vector<16x256xbf16>, vector<256x128xbf16>, vector<16x128xf32> -> vector<16x128xf32>
    %c0_3 = arith.constant 0 : index
    %c0_4 = arith.constant 0 : index
    %4 = vector.load %arg4[%c0_3, %c0_4] : memref<3x128xf32, #tpu.memory_space<vmem>>, vector<3x128xf32>
    %5 = vector.extract_strided_slice %4 {offsets = [0, 0], sizes = [1, 128], strides = [1, 1]} : vector<3x128xf32> to vector<1x128xf32>
    %6 = vector.extract_strided_slice %4 {offsets = [1, 0], sizes = [1, 128], strides = [1, 1]} : vector<3x128xf32> to vector<1x128xf32>
    %7 = vector.extract_strided_slice %4 {offsets = [2, 0], sizes = [1, 128], strides = [1, 1]} : vector<3x128xf32> to vector<1x128xf32>
    %c0_5 = arith.constant 0 : index
    %c0_6 = arith.constant 0 : index
    %8 = vector.load %arg2[%c0_5, %c0_6] : memref<16x128xf32, #tpu.memory_space<vmem>>, vector<16x128xf32>
    %9 = vector.broadcast %5 : vector<1x128xf32> to vector<16x128xf32>
    %10 = arith.addf %8, %9 : vector<16x128xf32>
    %11 = arith.addf %3, %10 : vector<16x128xf32>
    %cst_7 = arith.constant dense<0.000000e+00> : vector<16xf32>
    %12 = vector.multi_reduction <add>, %11, %cst_7 [1] : vector<16x128xf32> to vector<16xf32>
    %13 = vector.shape_cast %12 : vector<16xf32> to vector<16x1xf32>
    %cst_8 = arith.constant 1.280000e+02 : f32
    %14 = vector.broadcast %cst_8 : f32 to vector<16x1xf32>
    %15 = arith.divf %13, %14 : vector<16x1xf32>
    %16 = vector.broadcast %15 : vector<16x1xf32> to vector<16x128xf32>
    %17 = arith.subf %11, %16 : vector<16x128xf32>
    %18 = arith.mulf %17, %17 : vector<16x128xf32>
    %cst_9 = arith.constant dense<0.000000e+00> : vector<16xf32>
    %19 = vector.multi_reduction <add>, %18, %cst_9 [1] : vector<16x128xf32> to vector<16xf32>
    %20 = vector.shape_cast %19 : vector<16xf32> to vector<16x1xf32>
    %cst_10 = arith.constant 1.280000e+02 : f32
    %21 = vector.broadcast %cst_10 : f32 to vector<16x1xf32>
    %22 = arith.divf %20, %21 : vector<16x1xf32>
    %cst_11 = arith.constant 9.99999996E-13 : f32
    %23 = vector.broadcast %cst_11 : f32 to vector<16x1xf32>
    %24 = arith.addf %22, %23 : vector<16x1xf32>
    %25 = math.rsqrt %24 : vector<16x1xf32>
    %26 = vector.broadcast %25 : vector<16x1xf32> to vector<16x128xf32>
    %27 = arith.mulf %17, %26 : vector<16x128xf32>
    %28 = vector.broadcast %6 : vector<1x128xf32> to vector<16x128xf32>
    %29 = arith.mulf %27, %28 : vector<16x128xf32>
    %30 = vector.broadcast %7 : vector<1x128xf32> to vector<16x128xf32>
    %31 = arith.addf %29, %30 : vector<16x128xf32>
    %c0_12 = arith.constant 0 : index
    %c0_13 = arith.constant 0 : index
    %32 = vector.load %arg5[%c0_12, %c0_13] : memref<16x128xf32, #tpu.memory_space<vmem>>, vector<16x128xf32>
    tpu.vector_store %arg5[%c0_12, %c0_13], %31 {strides = array<i32>} : memref<16x128xf32, #tpu.memory_space<vmem>>, vector<16x128xf32>,
    return
  }
  func.func @transform_0(%arg0: i32) -> (i32, i32) {
    %c0_i32 = arith.constant 0 : i32
    %c0_i32_0 = arith.constant 0 : i32
    return %arg0, %c0_i32 : i32, i32
  }
  func.func @transform_1(%arg0: i32) -> (i32, i32) {
    %c0_i32 = arith.constant 0 : i32
    %c0_i32_0 = arith.constant 0 : i32
    return %arg0, %c0_i32 : i32, i32
  }
  func.func @transform_2(%arg0: i32) -> (i32, i32) {
    %c0_i32 = arith.constant 0 : i32
    %c0_i32_0 = arith.constant 0 : i32
    %c0_i32_1 = arith.constant 0 : i32
    return %c0_i32, %c0_i32_0 : i32, i32
  }
  func.func @transform_3(%arg0: i32) -> (i32, i32) {
    %c0_i32 = arith.constant 0 : i32
    %c0_i32_0 = arith.constant 0 : i32
    %c0_i32_1 = arith.constant 0 : i32
    return %c0_i32, %c0_i32_0 : i32, i32
  }
  func.func @transform_4(%arg0: i32) -> (i32, i32) {
    %c0_i32 = arith.constant 0 : i32
    %c0_i32_0 = arith.constant 0 : i32
    return %arg0, %c0_i32 : i32, i32
  }
}

</mosaic_0001>

<llo_original>
// kernel: tpu_custom_call.1
$region0: #{tpu_custom_call.1}
  #allocation0 [shape = 'u32[]', space=smem, size = 0x4, offset = 0x4, fixed_abs, tag = 'smem constant byte address 0x4 - core index']
  #allocation1 [shape = 'u32[144,128]{1,0:T(1,128)}', space=vmem, size = 0x12000, scoped, tag = 'internal scratch']
  %s0 = inlined_call_operand.hbm [shape: f32[16,256], index: 0, kind: input, shape index: {}]
  %s1 = inlined_call_operand.hbm [shape: f32[16,128], index: 1, kind: input, shape index: {}]
  %s2 = inlined_call_operand.hbm [shape: bf16[256,128], index: 2, kind: input, shape index: {}]
  %s3 = inlined_call_operand.vmem [shape: f32[3,128], index: 3, kind: input, shape index: {}]
  %s4 = inlined_call_operand.hbm [shape: f32[16,128], index: 4, kind: output, shape index: {}]
  %s5 = sld [smem:[#allocation0]]
  $region38: #{tpu_custom_call.1} parent=0
    _
  %s7 = ssub.s32 1, %s5
  %s8 = scalar_select 0, %s7, %s5
  $region1: #{tpu_custom_call.1} parent=0
    #allocation2 [shape = 'u8[16384]{0}', space=vmem, size = 0x4000, scoped, tag = 'input window, operand 0, single buffered']
    #allocation3 [shape = 's32[1]{0}', space=sflag, size = 0x4, scoped, tag = 'scoped memory for tpu_custom_call.1']
    #allocation4 [shape = 's32[1]{0}', space=sflag, size = 0x4, scoped, tag = 'scoped memory for tpu_custom_call.1']
    #allocation5 [shape = 'u8[8192]{0}', space=vmem, size = 0x2000, scoped, tag = 'input window, operand 1, single buffered']
    #allocation6 [shape = 's32[1]{0}', space=sflag, size = 0x4, scoped, tag = 'scoped memory for tpu_custom_call.1']
    #allocation7 [shape = 'u8[65536]{0}', space=vmem, size = 0x10000, scoped, tag = 'input window, operand 2, single buffered']
    #allocation8 [shape = 'u8[8192]{0}', space=vmem, size = 0x2000, scoped, tag = 'output window, operand 0, single buffered']
    %9 = vsyncpa [#allocation3], 0
    %10 = vsyncpa [#allocation6], 0
    %11 = vsyncpa [#allocation4], 0
    // Predicated region
    $region2: #{tpu_custom_call.1} parent=1 // pred_check
      _
    $region3: #{tpu_custom_call.1} parent=1 // pred_check_branch
      %13 = sbr.rel (0) target = $region5
    $region4: #{tpu_custom_call.1} parent=1 // pred_region
      %s15 = ssub.s32 512, 512
      %16 = vsyncadd [#allocation3], %s15
      %s17 = sshll.u32 [#allocation2], 4
      %s18 = int_to_ptr.vmem [resolvable:$true] %s17
      %23 = dma.hbm_to_vmem [thread:$0]  %s0, 512, %s18, [#allocation3], 256, 256, 16
    $region5: #{tpu_custom_call.1} parent=1 // pred_fallthru
      _
    // Predicated region
    $region6: #{tpu_custom_call.1} parent=1 // pred_check
      _
    $region7: #{tpu_custom_call.1} parent=1 // pred_check_branch
      %25 = sbr.rel (0) target = $region9
    $region8: #{tpu_custom_call.1} parent=1 // pred_region
      %s27 = ssub.s32 256, 256
      %28 = vsyncadd [#allocation6], %s27
      %s29 = sshll.u32 [#allocation5], 4
      %s30 = int_to_ptr.vmem [resolvable:$true] %s29
      %35 = dma.hbm_to_vmem [thread:$0]  %s1, 256, %s30, [#allocation6], 128, 128, 8
    $region9: #{tpu_custom_call.1} parent=1 // pred_fallthru
      _
    // Predicated region
    $region10: #{tpu_custom_call.1} parent=1 // pred_check
      _
    $region11: #{tpu_custom_call.1} parent=1 // pred_check_branch
      %37 = sbr.rel (0) target = $region13
    $region12: #{tpu_custom_call.1} parent=1 // pred_region
      %s39 = ssub.s32 2048, 2048
      %40 = vsyncadd [#allocation6], %s39
      %s41 = sshll.u32 [#allocation7], 4
      %s42 = int_to_ptr.vmem [resolvable:$true] %s41
      %47 = dma.hbm_to_vmem [thread:$0]  %s2, 2048, %s42, [#allocation6], 64, 64, 4
    $region13: #{tpu_custom_call.1} parent=1 // pred_fallthru
      _
    // Predicated region
    $region14: #{tpu_custom_call.1} parent=1 // pred_check
      _
    $region15: #{tpu_custom_call.1} parent=1 // pred_check_branch
      %49 = sbr.rel (0) target = $region17
    $region16: #{tpu_custom_call.1} parent=1 // pred_region
      _
    $region17: #{tpu_custom_call.1} parent=1 // pred_fallthru
      _
    // Predicated region
    $region18: #{tpu_custom_call.1} parent=1 // pred_check
      _
    $region19: #{tpu_custom_call.1} parent=1 // pred_check_branch
      %51 = sbr.rel (0) target = $region21
    $region20: #{tpu_custom_call.1} parent=1 // pred_region
      %52 = dma.done [#allocation3], 512
    $region21: #{tpu_custom_call.1} parent=1 // pred_fallthru
      _
    // Predicated region
    $region22: #{tpu_custom_call.1} parent=1 // pred_check
      _
    $region23: #{tpu_custom_call.1} parent=1 // pred_check_branch
      %54 = sbr.rel (0) target = $region25
    $region24: #{tpu_custom_call.1} parent=1 // pred_region
      %55 = dma.done [#allocation6], 256
    $region25: #{tpu_custom_call.1} parent=1 // pred_fallthru
      _
    // Predicated region
    $region26: #{tpu_custom_call.1} parent=1 // pred_check
      _
    $region27: #{tpu_custom_call.1} parent=1 // pred_check_branch
      %57 = sbr.rel (0) target = $region29
    $region28: #{tpu_custom_call.1} parent=1 // pred_region
      %58 = dma.done [#allocation6], 2048
    $region29: #{tpu_custom_call.1} parent=1 // pred_fallthru
      _
    %v60 = vld [vmem:[#allocation2] sm:$0xff]
    %v61 = vld [vmem:[#allocation2 + $0x8] sm:$0xff]
    %v62 = vld [vmem:[#allocation2 + $0x10] sm:$0xff]
    %v63 = vld [vmem:[#allocation2 + $0x18] sm:$0xff]
    %v64 = vpack.c.bf16 %v62, %v60
    %v65 = vpack.c.bf16 %v63, %v61
    %v66 = vld [vmem:[#allocation7] sm:$0xf]
    %v67 = vld [vmem:[#allocation7 + $0x4] sm:$0xf]
    %v68 = vld [vmem:[#allocation7 + $0x8] sm:$0xf]
    %v69 = vld [vmem:[#allocation7 + $0xc] sm:$0xf]
    %v70 = vld [vmem:[#allocation7 + $0x10] sm:$0xf]
    %v71 = vld [vmem:[#allocation7 + $0x14] sm:$0xf]
    %v72 = vld [vmem:[#allocation7 + $0x18] sm:$0xf]
    %v73 = vld [vmem:[#allocation7 + $0x1c] sm:$0xf]
    %v74 = vld [vmem:[#allocation7 + $0x20] sm:$0xf]
    %v75 = vld [vmem:[#allocation7 + $0x24] sm:$0xf]
    %v76 = vld [vmem:[#allocation7 + $0x28] sm:$0xf]
    %v77 = vld [vmem:[#allocation7 + $0x2c] sm:$0xf]
    %v78 = vld [vmem:[#allocation7 + $0x30] sm:$0xf]
    %v79 = vld [vmem:[#allocation7 + $0x34] sm:$0xf]
    %v80 = vld [vmem:[#allocation7 + $0x38] sm:$0xf]
    %v81 = vld [vmem:[#allocation7 + $0x3c] sm:$0xf]
    %v82 = vld [vmem:[#allocation7 + $0x40] sm:$0xf]
    %v83 = vld [vmem:[#allocation7 + $0x44] sm:$0xf]
    %v84 = vld [vmem:[#allocation7 + $0x48] sm:$0xf]
    %v85 = vld [vmem:[#allocation7 + $0x4c] sm:$0xf]
    %v86 = vld [vmem:[#allocation7 + $0x50] sm:$0xf]
    %v87 = vld [vmem:[#allocation7 + $0x54] sm:$0xf]
    %v88 = vld [vmem:[#allocation7 + $0x58] sm:$0xf]
    %v89 = vld [vmem:[#allocation7 + $0x5c] sm:$0xf]
    %v90 = vld [vmem:[#allocation7 + $0x60] sm:$0xf]
    %v91 = vld [vmem:[#allocation7 + $0x64] sm:$0xf]
    %v92 = vld [vmem:[#allocation7 + $0x68] sm:$0xf]
    %v93 = vld [vmem:[#allocation7 + $0x6c] sm:$0xf]
    %v94 = vld [vmem:[#allocation7 + $0x70] sm:$0xf]
    %v95 = vld [vmem:[#allocation7 + $0x74] sm:$0xf]
    %v96 = vld [vmem:[#allocation7 + $0x78] sm:$0xf]
    %v97 = vld [vmem:[#allocation7 + $0x7c] sm:$0xf]
    %v98 = vld [vmem:[%s3] sm:$0x7]
    %v99 = vld [vmem:[#allocation5] sm:$0xff]
    %v100 = vld [vmem:[#allocation5 + $0x8] sm:$0xff]
    %v101 = vlaneseq
    %v102 = vshrl.u32 %v101, 7
    %v103 = vsub.s32 0, %v102
    %v104 = vrot.slane %v98, %v103
    %v105 = vadd.f32 %v99, %v104
    %v106 = vadd.f32 %v100, %v104
    %v139 = vunpack.c.l.b16 %v66
    %v140 = vunpack.c.l.b16 %v67
    %v141 = vunpack.c.l.b16 %v68
    %v142 = vunpack.c.l.b16 %v69
    %v143 = vunpack.c.l.b16 %v70
    %v144 = vunpack.c.l.b16 %v71
    %v145 = vunpack.c.l.b16 %v72
    %v146 = vunpack.c.l.b16 %v73
    %v147 = vunpack.c.l.b16 %v74
    %v148 = vunpack.c.l.b16 %v75
    %v149 = vunpack.c.l.b16 %v76
    %v150 = vunpack.c.l.b16 %v77
    %v151 = vunpack.c.l.b16 %v78
    %v152 = vunpack.c.l.b16 %v79
    %v153 = vunpack.c.l.b16 %v80
    %v154 = vunpack.c.l.b16 %v81
    %v155 = vunpack.c.l.b16 %v82
    %v156 = vunpack.c.l.b16 %v83
    %v157 = vunpack.c.l.b16 %v84
    %v158 = vunpack.c.l.b16 %v85
    %v159 = vunpack.c.l.b16 %v86
    %v160 = vunpack.c.l.b16 %v87
    %v161 = vunpack.c.l.b16 %v88
    %v162 = vunpack.c.l.b16 %v89
    %v163 = vunpack.c.l.b16 %v90
    %v164 = vunpack.c.l.b16 %v91
    %v165 = vunpack.c.l.b16 %v92
    %v166 = vunpack.c.l.b16 %v93
    %v167 = vunpack.c.l.b16 %v94
    %v168 = vunpack.c.l.b16 %v95
    %v169 = vunpack.c.l.b16 %v96
    %v170 = vunpack.c.l.b16 %v97
    %v171 = vpack.c.b16 %v140, %v139
    %v172 = vpack.c.b16 %v142, %v141
    %v173 = vpack.c.b16 %v144, %v143
    %v174 = vpack.c.b16 %v146, %v145
    %v175 = vpack.c.b16 %v148, %v147
    %v176 = vpack.c.b16 %v150, %v149
    %v177 = vpack.c.b16 %v152, %v151
    %v178 = vpack.c.b16 %v154, %v153
    %v179 = vpack.c.b16 %v156, %v155
    %v180 = vpack.c.b16 %v158, %v157
    %v181 = vpack.c.b16 %v160, %v159
    %v182 = vpack.c.b16 %v162, %v161
    %v183 = vpack.c.b16 %v164, %v163
    %v184 = vpack.c.b16 %v166, %v165
    %v185 = vpack.c.b16 %v168, %v167
    %v186 = vpack.c.b16 %v170, %v169
    %203 = vmatprep.subr.bf16.mxu0 0
    %204 = vmatpush1.bf16.msra.mxu0 %v178
    %205 = vmatprep.subr.bf16.mxu0 0
    %206 = vmatpush1.bf16.msra.mxu0 %v177
    %207 = vmatprep.subr.bf16.mxu0 0
    %208 = vmatpush1.bf16.msra.mxu0 %v176
    %209 = vmatprep.subr.bf16.mxu0 0
    %210 = vmatpush1.bf16.msra.mxu0 %v175
    %211 = vmatprep.subr.bf16.mxu0 0
    %212 = vmatpush1.bf16.msra.mxu0 %v174
    %213 = vmatprep.subr.bf16.mxu0 0
    %214 = vmatpush1.bf16.msra.mxu0 %v173
    %215 = vmatprep.subr.bf16.mxu0 0
    %216 = vmatpush1.bf16.msra.mxu0 %v172
    %217 = vmatprep.subr.bf16.mxu0 0
    %218 = vmatpush1.bf16.msra.mxu0 %v171
    %219 = vmatprep.subr.bf16.mxu0 0
    %220 = vmatpush2.bf16.msra.mxu0 %v186
    %221 = vmatprep.subr.bf16.mxu0 0
    %222 = vmatpush2.bf16.msra.mxu0 %v185
    %223 = vmatprep.subr.bf16.mxu0 0
    %224 = vmatpush2.bf16.msra.mxu0 %v184
    %225 = vmatprep.subr.bf16.mxu0 0
    %226 = vmatpush2.bf16.msra.mxu0 %v183
    %227 = vmatprep.subr.bf16.mxu0 0
    %228 = vmatpush2.bf16.msra.mxu0 %v182
    %229 = vmatprep.subr.bf16.mxu0 0
    %230 = vmatpush2.bf16.msra.mxu0 %v181
    %231 = vmatprep.subr.bf16.mxu0 0
    %232 = vmatpush2.bf16.msra.mxu0 %v180
    %233 = vmatprep.subr.bf16.mxu0 0
    %234 = vmatpush2.bf16.msra.mxu0 %v179
    %235 = vmatprep.mubr.bf16.mxu0 %v65
    %236 = vmatmul.mubr.bf16.gmra.mxu0 %v64
    %v237 = vpop.f32.mrf.mxu0
    %v238 = vadd.f32 %v105, %v237
    %v239 = vpop.f32.mrf.mxu0
    %v240 = vpop.f32.mrf.mxu0
    %v241 = vadd.f32 %v106, %v240
    %v242 = vpop.f32.mrf.mxu0
    %243 = vdwg.mxu0
    %244 = vadd.xlane.f32.xlu0 %v238
    %v245 = vpop.xlane.xlu0 %244
    %246 = vadd.xlane.f32.xlu0 %v241
    %v247 = vpop.xlane.xlu0 %246
    %v248 = vrcp.pop 128.0
    %v249 = vmul.f32 %v245, %v248
    %v250 = vmul.f32 %v247, %v248
    %v251 = vsub.f32 %v238, %v249
    %v252 = vsub.f32 %v241, %v250
    %v253 = vmul.f32 %v251, %v251
    %v254 = vmul.f32 %v252, %v252
    %255 = vadd.xlane.f32.xlu0 %v253
    %v256 = vpop.xlane.xlu0 %255
    %257 = vadd.xlane.f32.xlu0 %v254
    %v258 = vpop.xlane.xlu0 %257
    %v259 = vmul.f32 %v256, %v248
    %v260 = vmul.f32 %v258, %v248
    %v261 = vadd.f32 %v259, 1e-12
    %v262 = vadd.f32 %v260, 1e-12
    %v263 = vrsqrt.pop %v261
    %v264 = vrsqrt.pop %v262
    %v265 = vmul.f32 %v251, %v263
    %v266 = vmul.f32 %v252, %v264
    %v267 = vlaneseq
    %v268 = vshrl.u32 %v267, 7
    %v269 = vsub.s32 1, %v268
    %v270 = vrot.slane %v98, %v269
    %v271 = vmul.f32 %v265, %v270
    %v272 = vmul.f32 %v266, %v270
    %v273 = vlaneseq
    %v274 = vshrl.u32 %v273, 7
    %v275 = vsub.s32 2, %v274
    %v276 = vrot.slane %v98, %v275
    %v277 = vadd.f32 %v271, %v276
    %v278 = vadd.f32 %v272, %v276
    %279 = vst [vmem:[#allocation8] sm:$0xff] %v277
    %280 = vst [vmem:[#allocation8 + $0x8] sm:$0xff] %v278
    // Predicated region
    $region30: #{tpu_custom_call.1} parent=1 // pred_check
      _
    $region31: #{tpu_custom_call.1} parent=1 // pred_check_branch
      %282 = sbr.rel (0) target = $region33
    $region32: #{tpu_custom_call.1} parent=1 // pred_region
      %s284 = ssub.s32 256, 256
      %285 = vsyncadd [#allocation4], %s284
      %s286 = sshll.u32 [#allocation8], 4
      %s287 = int_to_ptr.vmem [resolvable:$true] %s286
      %292 = dma.vmem_to_hbm [thread:$0]  %s287, 256, %s4, [#allocation4], 128, 128, 8
    $region33: #{tpu_custom_call.1} parent=1 // pred_fallthru
      _
    // Predicated region
    $region34: #{tpu_custom_call.1} parent=1 // pred_check
      _
    $region35: #{tpu_custom_call.1} parent=1 // pred_check_branch
      %294 = sbr.rel (0) target = $region37
    $region36: #{tpu_custom_call.1} parent=1 // pred_region
      %295 = dma.done [#allocation4], 256
    $region37: #{tpu_custom_call.1} parent=1 // pred_fallthru
      _
    %296 = vsyncpa [#allocation3], 1
    %297 = vsyncpa [#allocation6], 1
    %298 = vsyncpa [#allocation4], 1

</llo_original>
